<compile_context>
chip_gen: v7x
topology: tpu7x:2x2x1
jax: 0.10.0
libtpu: 0.0.40
codegen_flags: <defaults>
</compile_context>

<pallas_src>
import math

import jax
import jax.numpy as jnp
from jax import lax
from jax.experimental import pallas as pl
from jax.experimental.pallas import tpu as pltpu

_INV_SQRT2 = 1.0 / math.sqrt(2.0)
_LANE = 128
_SUBLANE = 8


def _round_up(x, m):
    return ((x + m - 1) // m) * m


def _vmem_budget_bytes():
    """Per-core VMEM budget with ~15% headroom for Mosaic scratch/spill.

    v5e/v6e: 128 MiB physical -> ~109 MiB budget (lifts the old flat 64 MiB cap).
    v7x:      64 MiB physical -> ~54  MiB budget (leaves compiler headroom).
    """
    cap = 128 * 1024 * 1024
    try:
        cap = int(pltpu.get_tpu_info().vmem_capacity_bytes)
    except Exception:
        pass
    return int(cap * 0.85)


def _spec(shape, index_map, *, single_buffer=False):
    """BlockSpec; single-buffer operands whose block index never changes."""
    if single_buffer:
        try:
            return pl.BlockSpec(shape, index_map, pipeline_mode=pl.Buffered(1))
        except Exception:
            pass  # older JAX without pipeline_mode/Buffered: default buffering
    return pl.BlockSpec(shape, index_map)


def _mlp_kernel(x_ref, w1_ref, b1_ref, w2_ref, b2_ref, o_ref, acc_ref):
    """One (row-tile, hidden-tile) step of  gelu(x @ W1 + b1) @ W2 + b2."""
    h_step = pl.program_id(1)

    @pl.when(h_step == 0)
    def _():
        acc_ref[...] = jnp.zeros_like(acc_ref)

    # layer1 (this hidden-column block): operands stay in their input dtype
    # (bf16 by default), f32 accumulation on the MXU.
    h = jnp.dot(x_ref[...], w1_ref[...], preferred_element_type=jnp.float32)
    h = h + b1_ref[...].astype(jnp.float32)

    # Dropout: eval-mode / p=0.0 -> identity.
    # TODO(synk): training-mode dropout needs pltpu.prng_seed/prng_random_bits.

    # nn.GELU() default in PyTorch is the exact erf form (VPU polynomial).
    # (Only swap to the tanh approximation if profiling shows a VALU bound at
    #  small dim AND exact-erf parity with the reference can be relaxed.)
    h = 0.5 * h * (1.0 + lax.erf(h * _INV_SQRT2))

    # layer2: accumulate this hidden block's contribution in f32.
    acc_ref[...] += jnp.dot(h.astype(w2_ref.dtype), w2_ref[...],
                            preferred_element_type=jnp.float32)

    @pl.when(h_step == pl.num_programs(1) - 1)
    def _():
        y = acc_ref[...] + b2_ref[...].astype(jnp.float32)
        o_ref[...] = y.astype(o_ref.dtype)


def prepare_params(w1, b1, w2, b2, *, compute_dtype=jnp.bfloat16):
    """Pad the feature dim to a multiple of 128 and cast weights ONCE.

    Hoisted out of the per-call hot path.  w1/w2 are (in, out); b1/b2 (dim,).
    Zero padding is exact: padded b1 entries are 0 so GELU(0)=0, and padded W2
    rows / b2 entries are 0, so the real output columns are unchanged.  Biases
    stay in their original (f32) dtype; they are added to the f32 accumulator.
    """
    dim = w1.shape[0]
    dim_p = _round_up(dim, _LANE)
    if compute_dtype is not None:
        w1 = w1.astype(compute_dtype)
        w2 = w2.astype(compute_dtype)
    if dim_p != dim:
        pf = dim_p - dim
        w1 = jnp.pad(w1, ((0, pf), (0, pf)))
        w2 = jnp.pad(w2, ((0, pf), (0, pf)))
        b1 = jnp.pad(b1, ((0, pf),))
        b2 = jnp.pad(b2, ((0, pf),))
    return dict(w1=w1, b1=b1.reshape(1, dim_p), w2=w2, b2=b2.reshape(1, dim_p),
                dim=dim, dim_p=dim_p, compute_dtype=compute_dtype)


def scale_or_shift(x, params, *, tile_m=None):
    """x: [..., dim]; params: output of prepare_params()."""
    w1, b1, w2, b2 = params["w1"], params["b1"], params["w2"], params["b2"]
    dim, dim_p = params["dim"], params["dim_p"]
    cdt = params["compute_dtype"]

    orig_shape = x.shape
    orig_dtype = x.dtype
    assert orig_shape[-1] == dim
    x2d = x.reshape(-1, dim)
    n = x2d.shape[0]
    if cdt is not None:
        x2d = x2d.astype(cdt)
    if dim_p != dim:
        x2d = jnp.pad(x2d, ((0, 0), (0, dim_p - dim)))

    in_isz = jnp.dtype(x2d.dtype).itemsize
    w_isz = jnp.dtype(w1.dtype).itemsize
    out_isz = jnp.dtype(orig_dtype).itemsize
    budget = _vmem_budget_bytes()

    # ---- row tile --------------------------------------------------------
    # Big enough to fill the MXU; 512 on 128-MiB parts (v5e/v6e) for moderate
    # dim, 256 otherwise.  Always a multiple of 8.  Split so grid_m >= 2 when
    # possible: the "parallel" M axis then shards across both v7x TensorCores
    # (a single extra grid step is negligible on v5e/v6e).
    if tile_m is None:
        tile_m = 512 if (budget >= 96 * 1024 * 1024 and dim_p <= 1536) else 256
    tile_m_eff = max(_SUBLANE,
                     min(_round_up(tile_m, _SUBLANE), _round_up(n, _SUBLANE)))
    if pl.cdiv(n, tile_m_eff) < 2 and n > _SUBLANE:
        tile_m_eff = _round_up((n + 1) // 2, _SUBLANE)
    grid_m = pl.cdiv(n, tile_m_eff)

    # ---- hidden tile -------------------------------------------------------
    # Keep both weights fully resident (single-buffered) when they fit the
    # VMEM budget; otherwise stream W1 column-blocks / W2 row-blocks along a
    # second ("arbitrary") grid axis and accumulate into f32 scratch.
    fixed = 2 * tile_m_eff * dim_p * in_isz        # x tile (double-buffered)
    fixed += 2 * tile_m_eff * dim_p * out_isz      # out tile (double-buffered)
    fixed += tile_m_eff * dim_p * 4                # f32 accumulator scratch
    fixed += 4 * dim_p * 4 * 2                     # biases (tiny)
    avail = budget - fixed
    if avail >= 2 * dim_p * dim_p * w_isz:
        tile_h = dim_p
    else:
        per_col = 2 * 2 * dim_p * w_isz            # W1 col + W2 row, 2 buffers
        max_cols = max(_LANE, avail // per_col)
        tile_h = _LANE
        t = _LANE
        while t <= dim_p:                          # largest 128-multiple divisor
            if dim_p % t == 0 and t <= max_cols:
                tile_h = t
            t += _LANE
    grid_h = dim_p // tile_h
    resident = grid_h == 1

    cost = pl.CostEstimate(
        flops=4 * n * dim_p * dim_p,               # two (dim_p x dim_p) matmuls
        transcendentals=n * dim_p,                 # erf per hidden element
        bytes_accessed=(x2d.size * in_isz + n * dim_p * out_isz
                        + (w1.size + w2.size) * w_isz
                        + (b1.size + b2.size) * 4),
    )

    out = pl.pallas_call(
        _mlp_kernel,
        out_shape=jax.ShapeDtypeStruct((n, dim_p), orig_dtype),
        grid_spec=pltpu.PrefetchScalarGridSpec(
            num_scalar_prefetch=0,
            grid=(grid_m, grid_h),
            in_specs=[
                pl.BlockSpec((tile_m_eff, dim_p), lambda i, h: (i, 0)),        # x
                _spec((dim_p, tile_h), lambda i, h: (0, h),
                      single_buffer=resident),                                 # W1
                _spec((1, tile_h), lambda i, h: (0, h),
                      single_buffer=resident),                                 # b1
                _spec((tile_h, dim_p), lambda i, h: (h, 0),
                      single_buffer=resident),                                 # W2
                _spec((1, dim_p), lambda i, h: (0, 0), single_buffer=True),    # b2
            ],
            out_specs=pl.BlockSpec((tile_m_eff, dim_p), lambda i, h: (i, 0)),
            scratch_shapes=[pltpu.VMEM((tile_m_eff, dim_p), jnp.float32)],
        ),
        compiler_params=pltpu.CompilerParams(
            dimension_semantics=("parallel", "arbitrary"),
            vmem_limit_bytes=budget,
        ),
        cost_estimate=cost,
    )(x2d, w1, b1, w2, b2)

    if dim_p != dim:
        out = out[:, :dim]
    return out.reshape(orig_shape)


def init_params(key, dim):
    """Deterministic init mimicking nn.Linear default (uniform +/- 1/sqrt(dim))."""
    k1, k2, k3, k4 = jax.random.split(key, 4)
    bound = 1.0 / math.sqrt(dim)
    # PyTorch Linear stores weight as (out, in); we keep (in, out) for x @ W.
    w1 = jax.random.uniform(k1, (dim, dim), jnp.float32, -bound, bound)
    b1 = jax.random.uniform(k2, (dim,), jnp.float32, -bound, bound)
    w2 = jax.random.uniform(k3, (dim, dim), jnp.float32, -bound, bound)
    b2 = jax.random.uniform(k4, (dim,), jnp.float32, -bound, bound)
    return w1, b1, w2, b2


def reference(x, w1, b1, w2, b2):
    h = x @ w1 + b1
    h = 0.5 * h * (1.0 + lax.erf(h / jnp.sqrt(2.0)))
    return h @ w2 + b2


if __name__ == "__main__":
    key = jax.random.PRNGKey(0)
    kx, kp = jax.random.split(key)

    batch, seq, dim = 2, 8, 32
    x = jax.random.normal(kx, (batch, seq, dim), jnp.float32)
    w1, b1, w2, b2 = init_params(kp, dim)
    ref = reference(x, w1, b1, w2, b2)

    # Exact-parity path: f32 operands (matches the PyTorch erf-GELU reference).
    params_f32 = prepare_params(w1, b1, w2, b2, compute_dtype=None)
    out_f32 = jax.block_until_ready(scale_or_shift(x, params_f32))
    assert out_f32.shape == x.shape and out_f32.dtype == x.dtype
    assert jnp.allclose(out_f32, ref, atol=1e-5, rtol=1e-5), "f32 path mismatch"

    # Default fast path: bf16 matmul operands, f32 accumulation (full MXU rate).
    params = prepare_params(w1, b1, w2, b2)            # compute_dtype=bfloat16
    out = jax.block_until_ready(scale_or_shift(x, params))
    assert out.shape == x.shape and out.dtype == x.dtype
    assert jnp.allclose(out, ref, atol=5e-2, rtol=5e-2), "bf16 path mismatch"

    print("KERNEL_OK")
</pallas_src>

<mosaic_0001>
module attributes {stable_mosaic.version = 11 : i64} {
  func.func @_mlp_kernel(%arg0: i32, %arg1: i32, %arg2: memref<8x128xf32, #tpu.memory_space<vmem>>, %arg3: memref<128x128xf32, #tpu.memory_space<vmem>>, %arg4: memref<1x128xf32, #tpu.memory_space<vmem>>, %arg5: memref<128x128xf32, #tpu.memory_space<vmem>>, %arg6: memref<1x128xf32, #tpu.memory_space<vmem>>, %arg7: memref<8x128xf32, #tpu.memory_space<vmem>>, %arg8: memref<8x128xf32, #tpu.memory_space<vmem>>) attributes {dimension_semantics = [#tpu.dimension_semantics<parallel>, #tpu.dimension_semantics<arbitrary>], iteration_bounds = array<i64: 2, 1>, scalar_prefetch = 0 : i64, scratch_operands = 1 : i64, tpu.core_type = #tpu.core_type<tc>, window_params = [{transform_indices = @transform_0, window_bounds = array<i64: 8, 128>}, {pipeline_mode = #tpu.pipeline_mode<synchronous>, transform_indices = @transform_1, window_bounds = array<i64: 128, 128>}, {pipeline_mode = #tpu.pipeline_mode<synchronous>, transform_indices = @transform_2, window_bounds = array<i64: 1, 128>}, {pipeline_mode = #tpu.pipeline_mode<synchronous>, transform_indices = @transform_3, window_bounds = array<i64: 128, 128>}, {pipeline_mode = #tpu.pipeline_mode<synchronous>, transform_indices = @transform_4, window_bounds = array<i64: 1, 128>}, {transform_indices = @transform_5, window_bounds = array<i64: 8, 128>}]} {
    %c0_i32 = arith.constant 0 : i32
    %0 = arith.cmpi eq, %arg1, %c0_i32 : i32
    %1 = arith.extui %0 : i1 to i32
    %c0_i32_0 = arith.constant 0 : i32
    %2 = arith.cmpi ne, %1, %c0_i32_0 : i32
    scf.if %2 {
      %cst_18 = arith.constant 0.000000e+00 : f32
      %25 = vector.broadcast %cst_18 : f32 to vector<8x128xf32>
      %c0_19 = arith.constant 0 : index
      %c0_20 = arith.constant 0 : index
      %26 = vector.load %arg8[%c0_19, %c0_20] : memref<8x128xf32, #tpu.memory_space<vmem>>, vector<8x128xf32>
      tpu.vector_store %arg8[%c0_19, %c0_20], %25 {strides = array<i32>} : memref<8x128xf32, #tpu.memory_space<vmem>>, vector<8x128xf32>,
    } else {
    }
    %c0 = arith.constant 0 : index
    %c0_1 = arith.constant 0 : index
    %3 = vector.load %arg2[%c0, %c0_1] : memref<8x128xf32, #tpu.memory_space<vmem>>, vector<8x128xf32>
    %c0_2 = arith.constant 0 : index
    %c0_3 = arith.constant 0 : index
    %4 = vector.load %arg3[%c0_2, %c0_3] : memref<128x128xf32, #tpu.memory_space<vmem>>, vector<128x128xf32>
    %cst = arith.constant dense<0.000000e+00> : vector<8x128xf32>
    %5 = tpu.matmul %3, %4, %cst {dimension_numbers = #tpu.dot_dimension_numbers<[1], [0], [0], [1], [0, 0, 1, 1], [], []>} : vector<8x128xf32>, vector<128x128xf32>, vector<8x128xf32> -> vector<8x128xf32>
    %c0_4 = arith.constant 0 : index
    %c0_5 = arith.constant 0 : index
    %6 = vector.load %arg4[%c0_4, %c0_5] : memref<1x128xf32, #tpu.memory_space<vmem>>, vector<1x128xf32>
    %7 = vector.broadcast %6 : vector<1x128xf32> to vector<8x128xf32>
    %8 = arith.addf %5, %7 : vector<8x128xf32>
    %cst_6 = arith.constant 5.000000e-01 : f32
    %9 = vector.broadcast %cst_6 : f32 to vector<8x128xf32>
    %10 = arith.mulf %9, %8 : vector<8x128xf32>
    %cst_7 = arith.constant 0.707106769 : f32
    %11 = vector.broadcast %cst_7 : f32 to vector<8x128xf32>
    %12 = arith.mulf %8, %11 : vector<8x128xf32>
    %13 = math.erf %12 : vector<8x128xf32>
    %cst_8 = arith.constant 1.000000e+00 : f32
    %14 = vector.broadcast %cst_8 : f32 to vector<8x128xf32>
    %15 = arith.addf %14, %13 : vector<8x128xf32>
    %16 = arith.mulf %10, %15 : vector<8x128xf32>
    %c0_9 = arith.constant 0 : index
    %c0_10 = arith.constant 0 : index
    %17 = vector.load %arg8[%c0_9, %c0_10] : memref<8x128xf32, #tpu.memory_space<vmem>>, vector<8x128xf32>
    %c0_11 = arith.constant 0 : index
    %c0_12 = arith.constant 0 : index
    %18 = vector.load %arg5[%c0_11, %c0_12] : memref<128x128xf32, #tpu.memory_space<vmem>>, vector<128x128xf32>
    %cst_13 = arith.constant dense<0.000000e+00> : vector<8x128xf32>
    %19 = tpu.matmul %16, %18, %cst_13 {dimension_numbers = #tpu.dot_dimension_numbers<[1], [0], [0], [1], [0, 0, 1, 1], [], []>} : vector<8x128xf32>, vector<128x128xf32>, vector<8x128xf32> -> vector<8x128xf32>
    %20 = arith.addf %17, %19 : vector<8x128xf32>
    %c0_14 = arith.constant 0 : index
    %c0_15 = arith.constant 0 : index
    %21 = vector.load %arg8[%c0_14, %c0_15] : memref<8x128xf32, #tpu.memory_space<vmem>>, vector<8x128xf32>
    tpu.vector_store %arg8[%c0_14, %c0_15], %20 {strides = array<i32>} : memref<8x128xf32, #tpu.memory_space<vmem>>, vector<8x128xf32>,
    %c0_i32_16 = arith.constant 0 : i32
    %22 = arith.cmpi eq, %arg1, %c0_i32_16 : i32
    %23 = arith.extui %22 : i1 to i32
    %c0_i32_17 = arith.constant 0 : i32
    %24 = arith.cmpi ne, %23, %c0_i32_17 : i32
    scf.if %24 {
      %c0_18 = arith.constant 0 : index
      %c0_19 = arith.constant 0 : index
      %25 = vector.load %arg8[%c0_18, %c0_19] : memref<8x128xf32, #tpu.memory_space<vmem>>, vector<8x128xf32>
      %c0_20 = arith.constant 0 : index
      %c0_21 = arith.constant 0 : index
      %26 = vector.load %arg6[%c0_20, %c0_21] : memref<1x128xf32, #tpu.memory_space<vmem>>, vector<1x128xf32>
      %27 = vector.broadcast %26 : vector<1x128xf32> to vector<8x128xf32>
      %28 = arith.addf %25, %27 : vector<8x128xf32>
      %c0_22 = arith.constant 0 : index
      %c0_23 = arith.constant 0 : index
      %29 = vector.load %arg7[%c0_22, %c0_23] : memref<8x128xf32, #tpu.memory_space<vmem>>, vector<8x128xf32>
      tpu.vector_store %arg7[%c0_22, %c0_23], %28 {strides = array<i32>} : memref<8x128xf32, #tpu.memory_space<vmem>>, vector<8x128xf32>,
    } else {
    }
    return
  }
  func.func @transform_0(%arg0: i32, %arg1: i32) -> (i32, i32) {
    %c0_i32 = arith.constant 0 : i32
    %c0_i32_0 = arith.constant 0 : i32
    return %arg0, %c0_i32 : i32, i32
  }
  func.func @transform_1(%arg0: i32, %arg1: i32) -> (i32, i32) {
    %c0_i32 = arith.constant 0 : i32
    %c0_i32_0 = arith.constant 0 : i32
    return %c0_i32, %arg1 : i32, i32
  }
  func.func @transform_2(%arg0: i32, %arg1: i32) -> (i32, i32) {
    %c0_i32 = arith.constant 0 : i32
    %c0_i32_0 = arith.constant 0 : i32
    return %c0_i32, %arg1 : i32, i32
  }
  func.func @transform_3(%arg0: i32, %arg1: i32) -> (i32, i32) {
    %c0_i32 = arith.constant 0 : i32
    %c0_i32_0 = arith.constant 0 : i32
    return %arg1, %c0_i32 : i32, i32
  }
  func.func @transform_4(%arg0: i32, %arg1: i32) -> (i32, i32) {
    %c0_i32 = arith.constant 0 : i32
    %c0_i32_0 = arith.constant 0 : i32
    %c0_i32_1 = arith.constant 0 : i32
    return %c0_i32, %c0_i32_0 : i32, i32
  }
  func.func @transform_5(%arg0: i32, %arg1: i32) -> (i32, i32) {
    %c0_i32 = arith.constant 0 : i32
    %c0_i32_0 = arith.constant 0 : i32
    return %arg0, %c0_i32 : i32, i32
  }
}

</mosaic_0001>

<llo_original>
// kernel: tpu_custom_call.1
$region0: #{tpu_custom_call.1}
  #allocation0 [shape = 'u32[]', space=smem, size = 0x4, offset = 0x4, fixed_abs, tag = 'smem constant byte address 0x4 - core index']
  #allocation1 [shape = 'u32[144,128]{1,0:T(1,128)}', space=vmem, size = 0x12000, scoped, tag = 'internal scratch']
  #allocation2 [shape = 'f32[8,128]{1,0:T(8,128)}', space=vmem, size = 0x1000, scoped, tag = 'scratch operand']
  %s0 = inlined_call_operand.hbm [shape: f32[16,128], index: 0, kind: input, shape index: {}]
  %s1 = inlined_call_operand.hbm [shape: f32[128,128], index: 1, kind: input, shape index: {}]
  %s2 = inlined_call_operand.hbm [shape: f32[1,128], index: 2, kind: input, shape index: {}]
  %s3 = inlined_call_operand.hbm [shape: f32[128,128], index: 3, kind: input, shape index: {}]
  %s4 = inlined_call_operand.hbm [shape: f32[1,128], index: 4, kind: input, shape index: {}]
  %s5 = inlined_call_operand.hbm [shape: f32[16,128], index: 5, kind: output, shape index: {}]
  %s6 = sld [smem:[#allocation0]]
  $region81: #{tpu_custom_call.1} parent=0
    _
  %s8 = ssub.s32 1, %s6
  %s9 = scalar_select 0, %s8, %s6
  $region1: #{tpu_custom_call.1} parent=0
    #allocation3 [shape = 'u8[8192]{0}', space=vmem, size = 0x2000, scoped, tag = 'input window, operand 0']
    #allocation4 [shape = 's32[2]{0}', space=sflag, size = 0x8, scoped, tag = 'scoped memory for tpu_custom_call.1']
    #allocation5 [shape = 's32[2]{0}', space=sflag, size = 0x8, scoped, tag = 'scoped memory for tpu_custom_call.1']
    #allocation6 [shape = 'u8[65536]{0}', space=vmem, size = 0x10000, scoped, tag = 'input window, operand 1, single buffered']
    #allocation7 [shape = 's32[1]{0}', space=sflag, size = 0x4, scoped, tag = 'scoped memory for tpu_custom_call.1']
    #allocation8 [shape = 'u8[512]{0}', space=vmem, size = 0x400, scoped, tag = 'input window, operand 2, single buffered']
    #allocation9 [shape = 'u8[65536]{0}', space=vmem, size = 0x10000, scoped, tag = 'input window, operand 3, single buffered']
    #allocation10 [shape = 's32[1]{0}', space=sflag, size = 0x4, scoped, tag = 'scoped memory for tpu_custom_call.1']
    #allocation11 [shape = 'u8[512]{0}', space=vmem, size = 0x400, scoped, tag = 'input window, operand 4, single buffered']
    #allocation12 [shape = 'u8[8192]{0}', space=vmem, size = 0x2000, scoped, tag = 'output window, operand 0']
    %10 = vsyncpa [#allocation4], 0
    %s11 = scalar_lea.sflag [#allocation4], 1
    %12 = vsyncpa %s11, 0
    %13 = vsyncpa [#allocation7], 0
    %14 = vsyncpa [#allocation10], 0
    %15 = vsyncpa [#allocation5], 0
    %s16 = scalar_lea.sflag [#allocation5], 1
    %17 = vsyncpa %s16, 0
    loop: start=0, step=1, limit=4
    $region2: #{tpu_custom_call.1} parent=1 // loop_pre_header
      _
    $region3: #{tpu_custom_call.1} parent=1 // loop_header
      %s19 = sphi 0, %s23
      %p20 = scmp.ge.s32.totalorder %s19, 4
      %s26 = sphi 0, %s38
      %s27 = sphi 0, %s34
      %s28 = sphi 0, %s26
      %s29 = sphi 0, %s27
      %s30 = sphi 0, %s28
      %s31 = sphi 0, %s29
      %s41 = sphi 0, %s43
      %s44 = sphi 0, %s41
      %s45 = sphi 0, %s44
      %s61 = sphi 0, %s45
      %s67 = sphi 0, %s69
      %s70 = sphi 0, %s67
      %s71 = sphi 0, %s70
      %s87 = sphi 0, %s71
      %s93 = sphi 0, %s95
      %s96 = sphi 0, %s93
      %s97 = sphi 0, %s96
      %s113 = sphi 0, %s97
      %s119 = sphi 0, %s121
      %s122 = sphi 0, %s119
      %s123 = sphi 0, %s122
      %s139 = sphi 0, %s123
      %s143 = sphi 0, %s143
      %s145 = sphi 0, %s143
      %s146 = sphi 0, %s145
      %s160 = sphi 0, %s146
      %s166 = sphi 0, %s168
      %s169 = sphi 0, %s166
      %s170 = sphi 0, %s169
      %s186 = sphi 0, %s170
    $region4: #{tpu_custom_call.1} parent=1 // loop_header_branch
      %22 = sbr.rel (%p20) target = $region8
    $region5: #{tpu_custom_call.1} parent=1 // loop_body
      %s24 = ssub.s32 %s19, 1
      %s25 = ssub.s32 %s19, 2
      %s32 = sadd.s32 1, %s27
      %p33 = scmp.ge.s32.totalorder %s32, 1
      %s34 = scalar_select %p33, 0, %s32
      %s35 = sadd.s32 1, %s26
      %s36 = scalar_select %p33, %s35, %s26
      %p37 = scmp.ge.s32.totalorder %s36, 2
      %s38 = scalar_select %p37, 0, %s36
      %s39 = ssub.s32 %s26, %s38
      %p40 = scmp.eq.s32.totalorder %s39, 0
      %s42 = sadd.s32 %s41, 1
      %s43 = scalar_select %p40, %s41, %s42
      %p46 = pneg %p40
      %p47 = scmp.eq.s32.totalorder %s19, 1
      %p48 = por %p46, %p47
      %p49 = scmp.ne.s32.totalorder %s41, %s44
      %p50 = scmp.eq.s32.totalorder %s19, 0
      %p51 = por %p49, %p50
      %p52 = scmp.ne.s32.totalorder %s41, %s44
      %p53 = scmp.eq.s32.totalorder %s24, 1
      %p54 = por %p52, %p53
      %p55 = scmp.ne.s32.totalorder %s44, %s45
      %p56 = scmp.eq.s32.totalorder %s24, 0
      %p57 = por %p55, %p56
      %p58 = scmp.ne.s32.totalorder %s44, %s45
      %p59 = scmp.eq.s32.totalorder %s25, 1
      %p60 = por %p58, %p59
      %p62 = scmp.ne.s32.totalorder %s45, %s61
      %p63 = scmp.eq.s32.totalorder %s25, 0
      %p64 = por %p62, %p63
      %s65 = ssub.s32 %s27, %s34
      %p66 = scmp.eq.s32.totalorder %s65, 0
      %s68 = sadd.s32 %s67, 1
      %s69 = scalar_select %p66, %s67, %s68
      %p72 = pneg %p66
      %p73 = scmp.eq.s32.totalorder %s19, 1
      %p74 = por %p72, %p73
      %p75 = scmp.ne.s32.totalorder %s67, %s70
      %p76 = scmp.eq.s32.totalorder %s19, 0
      %p77 = por %p75, %p76
      %p78 = scmp.ne.s32.totalorder %s67, %s70
      %p79 = scmp.eq.s32.totalorder %s24, 1
      %p80 = por %p78, %p79
      %p81 = scmp.ne.s32.totalorder %s70, %s71
      %p82 = scmp.eq.s32.totalorder %s24, 0
      %p83 = por %p81, %p82
      %p84 = scmp.ne.s32.totalorder %s70, %s71
      %p85 = scmp.eq.s32.totalorder %s25, 1
      %p86 = por %p84, %p85
      %p88 = scmp.ne.s32.totalorder %s71, %s87
      %p89 = scmp.eq.s32.totalorder %s25, 0
      %p90 = por %p88, %p89
      %s91 = ssub.s32 %s27, %s34
      %p92 = scmp.eq.s32.totalorder %s91, 0
      %s94 = sadd.s32 %s93, 1
      %s95 = scalar_select %p92, %s93, %s94
      %p98 = pneg %p92
      %p99 = scmp.eq.s32.totalorder %s19, 1
      %p100 = por %p98, %p99
      %p101 = scmp.ne.s32.totalorder %s93, %s96
      %p102 = scmp.eq.s32.totalorder %s19, 0
      %p103 = por %p101, %p102
      %p104 = scmp.ne.s32.totalorder %s93, %s96
      %p105 = scmp.eq.s32.totalorder %s24, 1
      %p106 = por %p104, %p105
      %p107 = scmp.ne.s32.totalorder %s96, %s97
      %p108 = scmp.eq.s32.totalorder %s24, 0
      %p109 = por %p107, %p108
      %p110 = scmp.ne.s32.totalorder %s96, %s97
      %p111 = scmp.eq.s32.totalorder %s25, 1
      %p112 = por %p110, %p111
      %p114 = scmp.ne.s32.totalorder %s97, %s113
      %p115 = scmp.eq.s32.totalorder %s25, 0
      %p116 = por %p114, %p115
      %s117 = ssub.s32 %s27, %s34
      %p118 = scmp.eq.s32.totalorder %s117, 0
      %s120 = sadd.s32 %s119, 1
      %s121 = scalar_select %p118, %s119, %s120
      %p124 = pneg %p118
      %p125 = scmp.eq.s32.totalorder %s19, 1
      %p126 = por %p124, %p125
      %p127 = scmp.ne.s32.totalorder %s119, %s122
      %p128 = scmp.eq.s32.totalorder %s19, 0
      %p129 = por %p127, %p128
      %p130 = scmp.ne.s32.totalorder %s119, %s122
      %p131 = scmp.eq.s32.totalorder %s24, 1
      %p132 = por %p130, %p131
      %p133 = scmp.ne.s32.totalorder %s122, %s123
      %p134 = scmp.eq.s32.totalorder %s24, 0
      %p135 = por %p133, %p134
      %p136 = scmp.ne.s32.totalorder %s122, %s123
      %p137 = scmp.eq.s32.totalorder %s25, 1
      %p138 = por %p136, %p137
      %p140 = scmp.ne.s32.totalorder %s123, %s139
      %p141 = scmp.eq.s32.totalorder %s25, 0
      %p142 = por %p140, %p141
      %s144 = sadd.s32 %s143, 1
      %p147 = scmp.eq.s32.totalorder %s19, 1
      %p148 = scmp.ne.s32.totalorder %s143, %s145
      %p149 = scmp.eq.s32.totalorder %s19, 0
      %p150 = por %p148, %p149
      %p151 = scmp.ne.s32.totalorder %s143, %s145
      %p152 = scmp.eq.s32.totalorder %s24, 1
      %p153 = por %p151, %p152
      %p154 = scmp.ne.s32.totalorder %s145, %s146
      %p155 = scmp.eq.s32.totalorder %s24, 0
      %p156 = por %p154, %p155
      %p157 = scmp.ne.s32.totalorder %s145, %s146
      %p158 = scmp.eq.s32.totalorder %s25, 1
      %p159 = por %p157, %p158
      %p161 = scmp.ne.s32.totalorder %s146, %s160
      %p162 = scmp.eq.s32.totalorder %s25, 0
      %p163 = por %p161, %p162
      %s164 = ssub.s32 %s26, %s38
      %p165 = scmp.eq.s32.totalorder %s164, 0
      %s167 = sadd.s32 %s166, 1
      %s168 = scalar_select %p165, %s166, %s167
      %p171 = pneg %p165
      %p172 = scmp.eq.s32.totalorder %s19, 1
      %p173 = por %p171, %p172
      %p174 = scmp.ne.s32.totalorder %s166, %s169
      %p175 = scmp.eq.s32.totalorder %s19, 0
      %p176 = por %p174, %p175
      %p177 = scmp.ne.s32.totalorder %s166, %s169
      %p178 = scmp.eq.s32.totalorder %s24, 1
      %p179 = por %p177, %p178
      %p180 = scmp.ne.s32.totalorder %s169, %s170
      %p181 = scmp.eq.s32.totalorder %s24, 0
      %p182 = por %p180, %p181
      %p183 = scmp.ne.s32.totalorder %s169, %s170
      %p184 = scmp.eq.s32.totalorder %s25, 1
      %p185 = por %p183, %p184
      %p187 = scmp.ne.s32.totalorder %s170, %s186
      %p188 = scmp.eq.s32.totalorder %s25, 0
      %p189 = por %p187, %p188
      %p190 = scmp.le.s32.totalorder 1, %s19
      %p191 = scmp.lt.s32.totalorder %s19, 3
      %p192 = pnand %p190, %p191
      %p193 = pneg %p192
      // Predicated region
      $region9: #{tpu_custom_call.1} parent=5 // pred_check
        _
      $region10: #{tpu_custom_call.1} parent=5 // pred_check_branch
        %195 = sbr.rel (%p192) target = $region12
      $region11: #{tpu_custom_call.1} parent=5 // pred_region
        %s196 = ssub.s32 %s19, 1
        // Predicated region
        $region13: #{tpu_custom_call.1} parent=11 // pred_check
          %p197 = pneg %p83
        $region14: #{tpu_custom_call.1} parent=11 // pred_check_branch
          %199 = sbr.rel (%p197) target = $region16
        $region15: #{tpu_custom_call.1} parent=11 // pred_region
          %s201 = ssub.s32 2048, 2048
          %202 = vsyncadd [#allocation7], %s201
          %s203 = smul.addr %s29, 128
          %s204 = scalar_lea.hbm %s1, %s203
          %s205 = sshll.u32 [#allocation6], 4
          %s206 = int_to_ptr.vmem [resolvable:$true] %s205
          %211 = dma.hbm_to_vmem [thread:$0]  %s204, 2048, %s206, [#allocation7], 128, 128, 8
        $region16: #{tpu_custom_call.1} parent=11 // pred_fallthru
          _
        // Predicated region
        $region17: #{tpu_custom_call.1} parent=11 // pred_check
          %p212 = pneg %p109
        $region18: #{tpu_custom_call.1} parent=11 // pred_check_branch
          %214 = sbr.rel (%p212) target = $region20
        $region19: #{tpu_custom_call.1} parent=11 // pred_region
          %s216 = ssub.s32 16, 16
          %217 = vsyncadd [#allocation7], %s216
          %s218 = smul.addr %s29, 16
          %s219 = scalar_lea.hbm %s2, %s218
          %s221 = sshll.u32 [#allocation8], 4
          %s222 = int_to_ptr.vmem [resolvable:$true] %s221
          %224 = dma.hbm_to_vmem [thread:$0]  %s219, 16, %s222, [#allocation7]
        $region20: #{tpu_custom_call.1} parent=11 // pred_fallthru
          _
        // Predicated region
        $region21: #{tpu_custom_call.1} parent=11 // pred_check
          %p225 = pneg %p135
        $region22: #{tpu_custom_call.1} parent=11 // pred_check_branch
          %227 = sbr.rel (%p225) target = $region24
        $region23: #{tpu_custom_call.1} parent=11 // pred_region
          %s228 = smul.u32 16, %s29
          %s230 = ssub.s32 2048, 2048
          %231 = vsyncadd [#allocation10], %s230
          %s232 = smul.addr %s228, 128
          %s233 = scalar_lea.hbm %s3, %s232
          %s234 = sshll.u32 [#allocation9], 4
          %s235 = int_to_ptr.vmem [resolvable:$true] %s234
          %240 = dma.hbm_to_vmem [thread:$0]  %s233, 2048, %s235, [#allocation10], 128, 128, 8
        $region24: #{tpu_custom_call.1} parent=11 // pred_fallthru
          _
        // Predicated region
        $region25: #{tpu_custom_call.1} parent=11 // pred_check
          %p241 = pneg %p156
        $region26: #{tpu_custom_call.1} parent=11 // pred_check_branch
          %243 = sbr.rel (%p241) target = $region28
        $region27: #{tpu_custom_call.1} parent=11 // pred_region
          %s245 = ssub.s32 16, 16
          %246 = vsyncadd [#allocation10], %s245
          %s248 = sshll.u32 [#allocation11], 4
          %s249 = int_to_ptr.vmem [resolvable:$true] %s248
          %251 = dma.hbm_to_vmem [thread:$0]  %s4, 16, %s249, [#allocation10]
        $region28: #{tpu_custom_call.1} parent=11 // pred_fallthru
          _
      $region12: #{tpu_custom_call.1} parent=5 // pred_fallthru
        _
      %p252 = scmp.lt.s32.totalorder %s19, 2
      // Predicated region
      $region29: #{tpu_custom_call.1} parent=5 // pred_check
        %p253 = pneg %p252
      $region30: #{tpu_custom_call.1} parent=5 // pred_check_branch
        %255 = sbr.rel (%p253) target = $region32
      $region31: #{tpu_custom_call.1} parent=5 // pred_region
        // Predicated region
        $region33: #{tpu_custom_call.1} parent=31 // pred_check
          %p256 = pneg %p51
        $region34: #{tpu_custom_call.1} parent=31 // pred_check_branch
          %258 = sbr.rel (%p256) target = $region36
        $region35: #{tpu_custom_call.1} parent=31 // pred_region
          %s259 = sand.u32 %s41, 1
          %s260 = scalar_lea.sflag [#allocation4], %s259
          %s261 = sand.u32 %s41, 1
          %s262 = smul.addr %s261, 8
          %s263 = scalar_lea.vmem [#allocation3], %s262
          %s265 = ssub.s32 128, 128
          %266 = vsyncadd %s260, %s265
          %s267 = smul.addr %s26, 128
          %s268 = scalar_lea.hbm %s0, %s267
          %s270 = sshll.u32 %s263, 4
          %s271 = int_to_ptr.vmem [resolvable:$true] %s270
          %273 = dma.hbm_to_vmem [thread:$0]  %s268, 128, %s271, %s260
        $region36: #{tpu_custom_call.1} parent=31 // pred_fallthru
          _
      $region32: #{tpu_custom_call.1} parent=5 // pred_fallthru
        _
      %p274 = scmp.le.s32.totalorder 1, %s19
      %p275 = scmp.lt.s32.totalorder %s19, 3
      %p276 = pnand %p274, %p275
      %p277 = pneg %p276
      // Predicated region
      $region37: #{tpu_custom_call.1} parent=5 // pred_check
        _
      $region38: #{tpu_custom_call.1} parent=5 // pred_check_branch
        %279 = sbr.rel (%p276) target = $region40
      $region39: #{tpu_custom_call.1} parent=5 // pred_region
        %s280 = ssub.s32 %s19, 1
        %s281 = sand.u32 %s44, 1
        %s282 = scalar_lea.sflag [#allocation4], %s281
        %s283 = sand.u32 %s44, 1
        %s284 = smul.addr %s283, 8
        %s285 = scalar_lea.vmem [#allocation3], %s284
        // Predicated region
        $region41: #{tpu_custom_call.1} parent=39 // pred_check
          %p286 = pneg %p57
        $region42: #{tpu_custom_call.1} parent=39 // pred_check_branch
          %288 = sbr.rel (%p286) target = $region44
        $region43: #{tpu_custom_call.1} parent=39 // pred_region
          %289 = dma.done %s282, 128
        $region44: #{tpu_custom_call.1} parent=39 // pred_fallthru
          _
        // Predicated region
        $region45: #{tpu_custom_call.1} parent=39 // pred_check
          %p290 = pneg %p83
        $region46: #{tpu_custom_call.1} parent=39 // pred_check_branch
          %292 = sbr.rel (%p290) target = $region48
        $region47: #{tpu_custom_call.1} parent=39 // pred_region
          %293 = dma.done [#allocation7], 2048
        $region48: #{tpu_custom_call.1} parent=39 // pred_fallthru
          _
        // Predicated region
        $region49: #{tpu_custom_call.1} parent=39 // pred_check
          %p294 = pneg %p109
        $region50: #{tpu_custom_call.1} parent=39 // pred_check_branch
          %296 = sbr.rel (%p294) target = $region52
        $region51: #{tpu_custom_call.1} parent=39 // pred_region
          %297 = dma.done [#allocation7], 16
        $region52: #{tpu_custom_call.1} parent=39 // pred_fallthru
          _
        // Predicated region
        $region53: #{tpu_custom_call.1} parent=39 // pred_check
          %p298 = pneg %p135
        $region54: #{tpu_custom_call.1} parent=39 // pred_check_branch
          %300 = sbr.rel (%p298) target = $region56
        $region55: #{tpu_custom_call.1} parent=39 // pred_region
          %301 = dma.done [#allocation10], 2048
        $region56: #{tpu_custom_call.1} parent=39 // pred_fallthru
          _
        // Predicated region
        $region57: #{tpu_custom_call.1} parent=39 // pred_check
          %p302 = pneg %p156
        $region58: #{tpu_custom_call.1} parent=39 // pred_check_branch
          %304 = sbr.rel (%p302) target = $region60
        $region59: #{tpu_custom_call.1} parent=39 // pred_region
          %305 = dma.done [#allocation10], 16
        $region60: #{tpu_custom_call.1} parent=39 // pred_fallthru
          _
        %s306 = sand.u32 %s44, 1
        %s307 = scalar_lea.sflag [#allocation4], %s306
        %s308 = sand.u32 %s44, 1
        %s309 = smul.addr %s308, 8
        %s310 = scalar_lea.vmem [#allocation3], %s309
        %p311 = pneg %p57
        %p312 = pneg %p54
        %p313 = pneg %p83
        %p314 = pneg %p80
        %p315 = pneg %p109
        %p316 = pneg %p106
        %p317 = pneg %p135
        %p318 = pneg %p132
        %p319 = pneg %p156
        %p320 = pneg %p153
        %p321 = pneg %p182
        %p322 = pneg %p179
        %s323 = sand.u32 %s169, 1
        %s324 = scalar_lea.sflag [#allocation5], %s323
        %s325 = sand.u32 %s169, 1
        %s326 = smul.addr %s325, 8
        %s327 = scalar_lea.vmem [#allocation12], %s326
        %s328 = smul.u32 16, %s29
        %p329 = scmp.eq.s32.totalorder %s29, 0
        // Predicated region
        $region61: #{tpu_custom_call.1} parent=39 // pred_check
          %p330 = pneg %p329
        $region62: #{tpu_custom_call.1} parent=39 // pred_check_branch
          %332 = sbr.rel (%p330) target = $region64
        $region63: #{tpu_custom_call.1} parent=39 // pred_region
          %333 = vst [vmem:[#allocation2] sm:$0xff] 0.0
        $region64: #{tpu_custom_call.1} parent=39 // pred_fallthru
          _
        %v334 = vld [vmem:[%s285] sm:$0xff]
        %v335 = vld [vmem:[#allocation6] sm:$0xff]
        %v336 = vld [vmem:[#allocation6 + $0x8] sm:$0xff]
        %v337 = vld [vmem:[#allocation6 + $0x10] sm:$0xff]
        %v338 = vld [vmem:[#allocation6 + $0x18] sm:$0xff]
        %v339 = vld [vmem:[#allocation6 + $0x20] sm:$0xff]
        %v340 = vld [vmem:[#allocation6 + $0x28] sm:$0xff]
        %v341 = vld [vmem:[#allocation6 + $0x30] sm:$0xff]
        %v342 = vld [vmem:[#allocation6 + $0x38] sm:$0xff]
        %v343 = vld [vmem:[#allocation6 + $0x40] sm:$0xff]
        %v344 = vld [vmem:[#allocation6 + $0x48] sm:$0xff]
        %v345 = vld [vmem:[#allocation6 + $0x50] sm:$0xff]
        %v346 = vld [vmem:[#allocation6 + $0x58] sm:$0xff]
        %v347 = vld [vmem:[#allocation6 + $0x60] sm:$0xff]
        %v348 = vld [vmem:[#allocation6 + $0x68] sm:$0xff]
        %v349 = vld [vmem:[#allocation6 + $0x70] sm:$0xff]
        %v350 = vld [vmem:[#allocation6 + $0x78] sm:$0xff]
        %v351 = vld [vmem:[#allocation8] sm:$0x1]
        %v353 = vlaneseq
        %v354 = vshrl.u32 %v353, 7
        %v355 = vsub.s32 0, %v354
        %v356 = vrot.slane %v351, %v355
        %358 = vmatprep.subr.mxu0 0.0
        %359 = vmatpush1.msra.mxu0 %v335
        %360 = vmatprep.subr.mxu0 0.0
        %361 = vmatpush1.msra.mxu0 %v336
        %362 = vmatprep.subr.mxu0 0.0
        %363 = vmatpush1.msra.mxu0 %v337
        %364 = vmatprep.subr.mxu0 0.0
        %365 = vmatpush1.msra.mxu0 %v338
        %366 = vmatprep.subr.mxu0 0.0
        %367 = vmatpush1.msra.mxu0 %v339
        %368 = vmatprep.subr.mxu0 0.0
        %369 = vmatpush1.msra.mxu0 %v340
        %370 = vmatprep.subr.mxu0 0.0
        %371 = vmatpush1.msra.mxu0 %v341
        %372 = vmatprep.subr.mxu0 0.0
        %373 = vmatpush1.msra.mxu0 %v342
        %374 = vmatprep.subr.mxu0 0.0
        %375 = vmatpush1.msra.mxu0 %v343
        %376 = vmatprep.subr.mxu0 0.0
        %377 = vmatpush1.msra.mxu0 %v344
        %378 = vmatprep.subr.mxu0 0.0
        %379 = vmatpush1.msra.mxu0 %v345
        %380 = vmatprep.subr.mxu0 0.0
        %381 = vmatpush1.msra.mxu0 %v346
        %382 = vmatprep.subr.mxu0 0.0
        %383 = vmatpush1.msra.mxu0 %v347
        %384 = vmatprep.subr.mxu0 0.0
        %385 = vmatpush1.msra.mxu0 %v348
        %386 = vmatprep.subr.mxu0 0.0
        %387 = vmatpush1.msra.mxu0 %v349
        %388 = vmatprep.subr.mxu0 0.0
        %389 = vmatpush1.msra.mxu0 %v350
        %390 = vmatprep.subr.mxu0 0.0
        %391 = vmatpush1.msra.mxu0 0.0
        %392 = vmatprep.subr.mxu0 0.0
        %393 = vmatpush1.msra.mxu0 0.0
        %394 = vmatprep.subr.mxu0 0.0
        %395 = vmatpush1.msra.mxu0 0.0
        %396 = vmatprep.subr.mxu0 0.0
        %397 = vmatpush1.msra.mxu0 0.0
        %398 = vmatprep.subr.mxu0 0.0
        %399 = vmatpush1.msra.mxu0 0.0
        %400 = vmatprep.subr.mxu0 0.0
        %401 = vmatpush1.msra.mxu0 0.0
        %402 = vmatprep.subr.mxu0 0.0
        %403 = vmatpush1.msra.mxu0 0.0
        %404 = vmatprep.subr.mxu0 0.0
        %405 = vmatpush1.msra.mxu0 0.0
        %406 = vmatprep.subr.mxu0 0.0
        %407 = vmatpush1.msra.mxu0 0.0
        %408 = vmatprep.subr.mxu0 0.0
        %409 = vmatpush1.msra.mxu0 0.0
        %410 = vmatprep.subr.mxu0 0.0
        %411 = vmatpush1.msra.mxu0 0.0
        %412 = vmatprep.subr.mxu0 0.0
        %413 = vmatpush1.msra.mxu0 0.0
        %414 = vmatprep.subr.mxu0 0.0
        %415 = vmatpush1.msra.mxu0 0.0
        %416 = vmatprep.subr.mxu0 0.0
        %417 = vmatpush1.msra.mxu0 0.0
        %418 = vmatprep.subr.mxu0 0.0
        %419 = vmatpush1.msra.mxu0 0.0
        %420 = vmatprep.subr.mxu0 0.0
        %421 = vmatpush1.msra.mxu0 0.0
        %422 = vmatprep.mubr.f32.mxu0 0.0
        %423 = vmatmul.mubr.f32.gmra.mrb[0].mxu0 %v334
        %v424 = vpop.f32.mrb[0].mxu0
        %v425 = vadd.f32 %v356, %v424
        %v426 = vpop.f32.mrb[0].mxu0
        %427 = vdwg.mxu0
        %v428 = vmul.f32 %v425, 0.5
        %v429 = vmul.f32 %v425, 0.70710677
        %v430 = verf.f32.pop %v429
        %v431 = vadd.f32 %v430, 1.0
        %v432 = vmul.f32 %v428, %v431
        %v433 = vld [vmem:[#allocation2] sm:$0xff]
        %v434 = vld [vmem:[#allocation9] sm:$0xff]
        %v435 = vld [vmem:[#allocation9 + $0x8] sm:$0xff]
        %v436 = vld [vmem:[#allocation9 + $0x10] sm:$0xff]
        %v437 = vld [vmem:[#allocation9 + $0x18] sm:$0xff]
        %v438 = vld [vmem:[#allocation9 + $0x20] sm:$0xff]
        %v439 = vld [vmem:[#allocation9 + $0x28] sm:$0xff]
        %v440 = vld [vmem:[#allocation9 + $0x30] sm:$0xff]
        %v441 = vld [vmem:[#allocation9 + $0x38] sm:$0xff]
        %v442 = vld [vmem:[#allocation9 + $0x40] sm:$0xff]
        %v443 = vld [vmem:[#allocation9 + $0x48] sm:$0xff]
        %v444 = vld [vmem:[#allocation9 + $0x50] sm:$0xff]
        %v445 = vld [vmem:[#allocation9 + $0x58] sm:$0xff]
        %v446 = vld [vmem:[#allocation9 + $0x60] sm:$0xff]
        %v447 = vld [vmem:[#allocation9 + $0x68] sm:$0xff]
        %v448 = vld [vmem:[#allocation9 + $0x70] sm:$0xff]
        %v449 = vld [vmem:[#allocation9 + $0x78] sm:$0xff]
        %450 = vmatprep.subr.mxu0 0.0
        %451 = vmatpush1.msra.mxu0 %v434
        %452 = vmatprep.subr.mxu0 0.0
        %453 = vmatpush1.msra.mxu0 %v435
        %454 = vmatprep.subr.mxu0 0.0
        %455 = vmatpush1.msra.mxu0 %v436
        %456 = vmatprep.subr.mxu0 0.0
        %457 = vmatpush1.msra.mxu0 %v437
        %458 = vmatprep.subr.mxu0 0.0
        %459 = vmatpush1.msra.mxu0 %v438
        %460 = vmatprep.subr.mxu0 0.0
        %461 = vmatpush1.msra.mxu0 %v439
        %462 = vmatprep.subr.mxu0 0.0
        %463 = vmatpush1.msra.mxu0 %v440
        %464 = vmatprep.subr.mxu0 0.0
        %465 = vmatpush1.msra.mxu0 %v441
        %466 = vmatprep.subr.mxu0 0.0
        %467 = vmatpush1.msra.mxu0 %v442
        %468 = vmatprep.subr.mxu0 0.0
        %469 = vmatpush1.msra.mxu0 %v443
        %470 = vmatprep.subr.mxu0 0.0
        %471 = vmatpush1.msra.mxu0 %v444
        %472 = vmatprep.subr.mxu0 0.0
        %473 = vmatpush1.msra.mxu0 %v445
        %474 = vmatprep.subr.mxu0 0.0
        %475 = vmatpush1.msra.mxu0 %v446
        %476 = vmatprep.subr.mxu0 0.0
        %477 = vmatpush1.msra.mxu0 %v447
        %478 = vmatprep.subr.mxu0 0.0
        %479 = vmatpush1.msra.mxu0 %v448
        %480 = vmatprep.subr.mxu0 0.0
        %481 = vmatpush1.msra.mxu0 %v449
        %482 = vmatprep.subr.mxu0 0.0
        %483 = vmatpush1.msra.mxu0 0.0
        %484 = vmatprep.subr.mxu0 0.0
        %485 = vmatpush1.msra.mxu0 0.0
        %486 = vmatprep.subr.mxu0 0.0
        %487 = vmatpush1.msra.mxu0 0.0
        %488 = vmatprep.subr.mxu0 0.0
        %489 = vmatpush1.msra.mxu0 0.0
        %490 = vmatprep.subr.mxu0 0.0
        %491 = vmatpush1.msra.mxu0 0.0
        %492 = vmatprep.subr.mxu0 0.0
        %493 = vmatpush1.msra.mxu0 0.0
        %494 = vmatprep.subr.mxu0 0.0
        %495 = vmatpush1.msra.mxu0 0.0
        %496 = vmatprep.subr.mxu0 0.0
        %497 = vmatpush1.msra.mxu0 0.0
        %498 = vmatprep.subr.mxu0 0.0
        %499 = vmatpush1.msra.mxu0 0.0
        %500 = vmatprep.subr.mxu0 0.0
        %501 = vmatpush1.msra.mxu0 0.0
        %502 = vmatprep.subr.mxu0 0.0
        %503 = vmatpush1.msra.mxu0 0.0
        %504 = vmatprep.subr.mxu0 0.0
        %505 = vmatpush1.msra.mxu0 0.0
        %506 = vmatprep.subr.mxu0 0.0
        %507 = vmatpush1.msra.mxu0 0.0
        %508 = vmatprep.subr.mxu0 0.0
        %509 = vmatpush1.msra.mxu0 0.0
        %510 = vmatprep.subr.mxu0 0.0
        %511 = vmatpush1.msra.mxu0 0.0
        %512 = vmatprep.subr.mxu0 0.0
        %513 = vmatpush1.msra.mxu0 0.0
        %514 = vmatprep.mubr.f32.mxu0 0.0
        %515 = vmatmul.mubr.f32.gmra.mrb[0].mxu0 %v432
        %v516 = vpop.f32.mrb[0].mxu0
        %v517 = vadd.f32 0.0, %v516
        %v518 = vpop.f32.mrb[0].mxu0
        %519 = vdwg.mxu0
        %v520 = vadd.f32 %v433, %v517
        %521 = vst [vmem:[#allocation2] sm:$0xff] %v520
        // Predicated region
        $region65: #{tpu_custom_call.1} parent=39 // pred_check
          %p522 = pneg %p329
        $region66: #{tpu_custom_call.1} parent=39 // pred_check_branch
          %524 = sbr.rel (%p522) target = $region68
        $region67: #{tpu_custom_call.1} parent=39 // pred_region
          %v525 = vld [vmem:[#allocation2] sm:$0xff]
          %v526 = vld [vmem:[#allocation11] sm:$0x1]
          %v528 = vlaneseq
          %v529 = vshrl.u32 %v528, 7
          %v530 = vsub.s32 0, %v529
          %v531 = vrot.slane %v526, %v530
          %v533 = vadd.f32 %v525, %v531
          %534 = vst [vmem:[%s327] sm:$0xff] %v533
        $region68: #{tpu_custom_call.1} parent=39 // pred_fallthru
          _
        %s535 = sand.u32 %s169, 1
        %s536 = scalar_lea.sflag [#allocation5], %s535
        %s537 = sand.u32 %s169, 1
        %s538 = smul.addr %s537, 8
        %s539 = scalar_lea.vmem [#allocation12], %s538
        // Predicated region
        $region69: #{tpu_custom_call.1} parent=39 // pred_check
          %p540 = pneg %p179
        $region70: #{tpu_custom_call.1} parent=39 // pred_check_branch
          %542 = sbr.rel (%p540) target = $region72
        $region71: #{tpu_custom_call.1} parent=39 // pred_region
          %s544 = ssub.s32 128, 128
          %545 = vsyncadd %s536, %s544
          %s546 = smul.addr %s28, 128
          %s547 = scalar_lea.hbm %s5, %s546
          %s549 = sshll.u32 %s539, 4
          %s550 = int_to_ptr.vmem [resolvable:$true] %s549
          %552 = dma.vmem_to_hbm [thread:$0]  %s550, 128, %s547, %s536
        $region72: #{tpu_custom_call.1} parent=39 // pred_fallthru
          _
      $region40: #{tpu_custom_call.1} parent=5 // pred_fallthru
        _
      %p553 = scmp.le.s32.totalorder 2, %s19
      // Predicated region
      $region73: #{tpu_custom_call.1} parent=5 // pred_check
        %p554 = pneg %p553
      $region74: #{tpu_custom_call.1} parent=5 // pred_check_branch
        %556 = sbr.rel (%p554) target = $region76
      $region75: #{tpu_custom_call.1} parent=5 // pred_region
        %s557 = ssub.s32 %s19, 2
        // Predicated region
        $region77: #{tpu_custom_call.1} parent=75 // pred_check
          %p558 = pneg %p185
        $region78: #{tpu_custom_call.1} parent=75 // pred_check_branch
          %560 = sbr.rel (%p558) target = $region80
        $region79: #{tpu_custom_call.1} parent=75 // pred_region
          %s561 = sand.u32 %s170, 1
          %s562 = scalar_lea.sflag [#allocation5], %s561
          %s563 = sand.u32 %s170, 1
          %s564 = smul.addr %s563, 8
          %s565 = scalar_lea.vmem [#allocation12], %s564
          %566 = dma.done %s562, 128
        $region80: #{tpu_custom_call.1} parent=75 // pred_fallthru
          _
      $region76: #{tpu_custom_call.1} parent=5 // pred_fallthru
        _
    $region6: #{tpu_custom_call.1} parent=1 // loop_footer
      %s23 = sadd.s32 1, %s19
    $region7: #{tpu_custom_call.1} parent=1 // loop_footer_branch
      %18 = sbr.rel target = $region3
    $region8: #{tpu_custom_call.1} parent=1 // loop_exit
      _
    %567 = vsyncpa [#allocation4], 1
    %s568 = scalar_lea.sflag [#allocation4], 1
    %569 = vsyncpa %s568, 1
    %570 = vsyncpa [#allocation7], 1
    %571 = vsyncpa [#allocation10], 1
    %572 = vsyncpa [#allocation5], 1
    %s573 = scalar_lea.sflag [#allocation5], 1
    %574 = vsyncpa %s573, 1

</llo_original>
